<compile_context>
chip_gen: v7x
topology: tpu7x:2x2x1
jax: 0.10.0
libtpu: 0.0.40
codegen_flags: <defaults>
</compile_context>

<pallas_src>
import functools
import math

import jax
import jax.numpy as jnp
from jax.experimental import pallas as pl
from jax.experimental.pallas import tpu as pltpu


def _round_up(v, m):
    return ((v + m - 1) // m) * m


def _linear_svd_kernel(x_ref, w_ref, ls_ref, b_ref, o_ref, acc_ref, *, log_threshold):
    k = pl.program_id(2)

    @pl.when(k == 0)
    def _():
        acc_ref[...] = jnp.zeros_like(acc_ref)

    w = w_ref[...]                                           # (tn, tk)
    log_alpha = ls_ref[...] * 2.0 - 2.0 * jnp.log(1e-16 + jnp.abs(w))
    log_alpha = jnp.clip(log_alpha, -10.0, 10.0)
    # exp(log_alpha) < threshold  <=>  log_alpha < log(threshold)  (no EUP exp)
    w_masked = jnp.where(log_alpha < log_threshold, w, jnp.zeros_like(w))

    # x (tm, tk) @ W_masked.T (tk, tn) without materializing the transpose:
    # contract dim 1 of both operands; MXU handles the transposed RHS natively.
    acc_ref[...] += jax.lax.dot_general(
        x_ref[...], w_masked,
        dimension_numbers=(((1,), (1,)), ((), ())),
        preferred_element_type=jnp.float32,
    )

    @pl.when(k == pl.num_programs(2) - 1)
    def _():
        o_ref[...] = (acc_ref[...] + b_ref[...]).astype(o_ref.dtype)


def linear_svd_forward(x, W, log_sigma, bias=None, *, threshold_raw=0.5,
                       tm=256, tn=256, tk=512):
    """Eval-mode forward of LinearSVD as a tiled, pipelined Pallas kernel."""
    batch, in_features = x.shape
    out_features, in_w = W.shape
    assert in_w == in_features

    threshold = threshold_raw / (1.0 - threshold_raw)
    log_threshold = math.log(threshold)

    if bias is None:
        bias = jnp.zeros((1, out_features), dtype=jnp.float32)

    # Tile sizes: clamp to (padded) array dims, keep (8, 128) alignment.
    tm = min(tm, _round_up(batch, 8))
    tn = min(tn, _round_up(out_features, 128))
    tk = min(tk, _round_up(in_features, 128))

    pb = _round_up(batch, tm)
    po = _round_up(out_features, tn)
    pi = _round_up(in_features, tk)

    if (pb, pi) != (batch, in_features):
        x = jnp.pad(x, ((0, pb - batch), (0, pi - in_features)))
    if (po, pi) != (out_features, in_features):
        W = jnp.pad(W, ((0, po - out_features), (0, pi - in_features)))
        log_sigma = jnp.pad(log_sigma, ((0, po - out_features), (0, pi - in_features)))
    if po != out_features:
        bias = jnp.pad(bias, ((0, 0), (0, po - out_features)))

    grid = (pb // tm, po // tn, pi // tk)

    kernel = functools.partial(_linear_svd_kernel, log_threshold=log_threshold)

    out = pl.pallas_call(
        kernel,
        out_shape=jax.ShapeDtypeStruct((pb, po), jnp.float32),
        grid_spec=pltpu.PrefetchScalarGridSpec(
            num_scalar_prefetch=0,
            grid=grid,
            in_specs=[
                pl.BlockSpec((tm, tk), lambda i, j, k: (i, k)),   # x
                pl.BlockSpec((tn, tk), lambda i, j, k: (j, k)),   # W
                pl.BlockSpec((tn, tk), lambda i, j, k: (j, k)),   # log_sigma
                pl.BlockSpec((1, tn), lambda i, j, k: (0, j)),    # bias
            ],
            out_specs=pl.BlockSpec((tm, tn), lambda i, j, k: (i, j)),
            scratch_shapes=[pltpu.VMEM((tm, tn), jnp.float32)],
        ),
        compiler_params=pltpu.CompilerParams(
            dimension_semantics=("parallel", "parallel", "arbitrary"),
            vmem_limit_bytes=32 * 1024 * 1024,
        ),
    )(x, W, log_sigma, bias)

    if pb != batch or po != out_features:
        out = out[:batch, :out_features]
    return out


def _reference(x, W, log_sigma, bias, threshold_raw=0.5):
    threshold = threshold_raw / (1.0 - threshold_raw)
    log_alpha = log_sigma * 2.0 - 2.0 * jnp.log(1e-16 + jnp.abs(W))
    log_alpha = jnp.clip(log_alpha, -10.0, 10.0)
    mask = (jnp.exp(log_alpha) < threshold).astype(W.dtype)
    y = jax.lax.dot_general(
        x, W * mask,
        dimension_numbers=(((1,), (1,)), ((), ())),
        precision=jax.lax.Precision.HIGHEST,
        preferred_element_type=jnp.float32,
    )
    return y + bias


if __name__ == "__main__":
    key = jax.random.PRNGKey(0)

    # --- Test 1: aligned shapes, small tiles so the (i, j, k) grid really
    #             steps (grid = (1, 2, 2)) and the K-accumulator is exercised.
    batch, in_features, out_features = 8, 256, 256
    k_x, k_w, k_s, k_b = jax.random.split(key, 4)
    x = jax.random.normal(k_x, (batch, in_features), dtype=jnp.float32)
    W = 0.02 * jax.random.normal(k_w, (out_features, in_features), dtype=jnp.float32)
    # Spread log_sigma so some weights are pruned and some kept (exercise mask).
    log_sigma = -2.0 + 2.0 * jax.random.normal(
        k_s, (out_features, in_features), dtype=jnp.float32)
    bias = 0.1 * jax.random.normal(k_b, (1, out_features), dtype=jnp.float32)

    out = linear_svd_forward(x, W, log_sigma, bias, tm=8, tn=128, tk=128)
    out = jax.block_until_ready(out)
    ref = _reference(x, W, log_sigma, bias)
    assert out.shape == (batch, out_features)
    assert jnp.allclose(out, ref, atol=2e-5, rtol=2e-5), "mismatch vs reference (test 1)"

    # --- Test 2: non-aligned shapes, default tiles -> exercises padding path.
    b2, i2, o2 = 5, 200, 96
    k_x2, k_w2, k_s2 = jax.random.split(jax.random.PRNGKey(1), 3)
    x2 = jax.random.normal(k_x2, (b2, i2), dtype=jnp.float32)
    W2 = 0.02 * jax.random.normal(k_w2, (o2, i2), dtype=jnp.float32)
    ls2 = -2.0 + 2.0 * jax.random.normal(k_s2, (o2, i2), dtype=jnp.float32)
    b_2 = jnp.zeros((1, o2), dtype=jnp.float32)   # matches _init_weights()

    out2 = linear_svd_forward(x2, W2, ls2, b_2)
    out2 = jax.block_until_ready(out2)
    ref2 = _reference(x2, W2, ls2, b_2)
    assert out2.shape == (b2, o2)
    assert jnp.allclose(out2, ref2, atol=2e-5, rtol=2e-5), "mismatch vs reference (test 2)"

    print("KERNEL_OK")
</pallas_src>

<mosaic_0001>
module attributes {stable_mosaic.version = 11 : i64} {
  func.func @_linear_svd_kernel(%arg0: i32, %arg1: i32, %arg2: i32, %arg3: memref<8x128xf32, #tpu.memory_space<vmem>>, %arg4: memref<128x128xf32, #tpu.memory_space<vmem>>, %arg5: memref<128x128xf32, #tpu.memory_space<vmem>>, %arg6: memref<1x128xf32, #tpu.memory_space<vmem>>, %arg7: memref<8x128xf32, #tpu.memory_space<vmem>>, %arg8: memref<8x128xf32, #tpu.memory_space<vmem>>) attributes {dimension_semantics = [#tpu.dimension_semantics<parallel>, #tpu.dimension_semantics<parallel>, #tpu.dimension_semantics<arbitrary>], iteration_bounds = array<i64: 1, 2, 2>, scalar_prefetch = 0 : i64, scratch_operands = 1 : i64, tpu.core_type = #tpu.core_type<tc>, window_params = [{transform_indices = @transform_0, window_bounds = array<i64: 8, 128>}, {transform_indices = @transform_1, window_bounds = array<i64: 128, 128>}, {transform_indices = @transform_2, window_bounds = array<i64: 128, 128>}, {transform_indices = @transform_3, window_bounds = array<i64: 1, 128>}, {transform_indices = @transform_4, window_bounds = array<i64: 8, 128>}]} {
    %c0_i32 = arith.constant 0 : i32
    %0 = arith.cmpi eq, %arg2, %c0_i32 : i32
    %1 = arith.extui %0 : i1 to i32
    %c0_i32_0 = arith.constant 0 : i32
    %2 = arith.cmpi ne, %1, %c0_i32_0 : i32
    scf.if %2 {
      %cst_18 = arith.constant 0.000000e+00 : f32
      %30 = vector.broadcast %cst_18 : f32 to vector<8x128xf32>
      %c0_19 = arith.constant 0 : index
      %c0_20 = arith.constant 0 : index
      %31 = vector.load %arg8[%c0_19, %c0_20] : memref<8x128xf32, #tpu.memory_space<vmem>>, vector<8x128xf32>
      tpu.vector_store %arg8[%c0_19, %c0_20], %30 {strides = array<i32>} : memref<8x128xf32, #tpu.memory_space<vmem>>, vector<8x128xf32>,
    } else {
    }
    %c0 = arith.constant 0 : index
    %c0_1 = arith.constant 0 : index
    %3 = vector.load %arg4[%c0, %c0_1] : memref<128x128xf32, #tpu.memory_space<vmem>>, vector<128x128xf32>
    %c0_2 = arith.constant 0 : index
    %c0_3 = arith.constant 0 : index
    %4 = vector.load %arg5[%c0_2, %c0_3] : memref<128x128xf32, #tpu.memory_space<vmem>>, vector<128x128xf32>
    %cst = arith.constant 2.000000e+00 : f32
    %5 = vector.broadcast %cst : f32 to vector<128x128xf32>
    %6 = arith.mulf %4, %5 : vector<128x128xf32>
    %7 = math.absf %3 : vector<128x128xf32>
    %cst_4 = arith.constant 1.000000e-16 : f32
    %8 = vector.broadcast %cst_4 : f32 to vector<128x128xf32>
    %9 = arith.addf %8, %7 : vector<128x128xf32>
    %10 = math.log %9 : vector<128x128xf32>
    %cst_5 = arith.constant 2.000000e+00 : f32
    %11 = vector.broadcast %cst_5 : f32 to vector<128x128xf32>
    %12 = arith.mulf %11, %10 : vector<128x128xf32>
    %13 = arith.subf %6, %12 : vector<128x128xf32>
    %cst_6 = arith.constant -1.000000e+01 : f32
    %cst_7 = arith.constant 1.000000e+01 : f32
    %14 = vector.broadcast %cst_6 : f32 to vector<128x128xf32>
    %15 = arith.maximumf %14, %13 : vector<128x128xf32>
    %16 = vector.broadcast %cst_7 : f32 to vector<128x128xf32>
    %17 = arith.minimumf %16, %15 : vector<128x128xf32>
    %cst_8 = arith.constant 0.000000e+00 : f32
    %18 = vector.broadcast %cst_8 : f32 to vector<128x128xf32>
    %19 = arith.cmpf olt, %17, %18 : vector<128x128xf32>
    %cst_9 = arith.constant 0.000000e+00 : f32
    %20 = vector.broadcast %cst_9 : f32 to vector<128x128xf32>
    %21 = arith.select %19, %3, %20 : vector<128x128xi1>, vector<128x128xf32>
    %c0_10 = arith.constant 0 : index
    %c0_11 = arith.constant 0 : index
    %22 = vector.load %arg8[%c0_10, %c0_11] : memref<8x128xf32, #tpu.memory_space<vmem>>, vector<8x128xf32>
    %c0_12 = arith.constant 0 : index
    %c0_13 = arith.constant 0 : index
    %23 = vector.load %arg3[%c0_12, %c0_13] : memref<8x128xf32, #tpu.memory_space<vmem>>, vector<8x128xf32>
    %cst_14 = arith.constant dense<0.000000e+00> : vector<8x128xf32>
    %24 = tpu.matmul %23, %21, %cst_14 {dimension_numbers = #tpu.dot_dimension_numbers<[1], [1], [0], [0], [0, 0, 1, 0], [], []>} : vector<8x128xf32>, vector<128x128xf32>, vector<8x128xf32> -> vector<8x128xf32>
    %25 = arith.addf %22, %24 : vector<8x128xf32>
    %c0_15 = arith.constant 0 : index
    %c0_16 = arith.constant 0 : index
    %26 = vector.load %arg8[%c0_15, %c0_16] : memref<8x128xf32, #tpu.memory_space<vmem>>, vector<8x128xf32>
    tpu.vector_store %arg8[%c0_15, %c0_16], %25 {strides = array<i32>} : memref<8x128xf32, #tpu.memory_space<vmem>>, vector<8x128xf32>,
    %c1_i32 = arith.constant 1 : i32
    %27 = arith.cmpi eq, %arg2, %c1_i32 : i32
    %28 = arith.extui %27 : i1 to i32
    %c0_i32_17 = arith.constant 0 : i32
    %29 = arith.cmpi ne, %28, %c0_i32_17 : i32
    scf.if %29 {
      %c0_18 = arith.constant 0 : index
      %c0_19 = arith.constant 0 : index
      %30 = vector.load %arg8[%c0_18, %c0_19] : memref<8x128xf32, #tpu.memory_space<vmem>>, vector<8x128xf32>
      %c0_20 = arith.constant 0 : index
      %c0_21 = arith.constant 0 : index
      %31 = vector.load %arg6[%c0_20, %c0_21] : memref<1x128xf32, #tpu.memory_space<vmem>>, vector<1x128xf32>
      %32 = vector.broadcast %31 : vector<1x128xf32> to vector<8x128xf32>
      %33 = arith.addf %30, %32 : vector<8x128xf32>
      %c0_22 = arith.constant 0 : index
      %c0_23 = arith.constant 0 : index
      %34 = vector.load %arg7[%c0_22, %c0_23] : memref<8x128xf32, #tpu.memory_space<vmem>>, vector<8x128xf32>
      tpu.vector_store %arg7[%c0_22, %c0_23], %33 {strides = array<i32>} : memref<8x128xf32, #tpu.memory_space<vmem>>, vector<8x128xf32>,
    } else {
    }
    return
  }
  func.func @transform_0(%arg0: i32, %arg1: i32, %arg2: i32) -> (i32, i32) {
    %c0_i32 = arith.constant 0 : i32
    return %arg0, %arg2 : i32, i32
  }
  func.func @transform_1(%arg0: i32, %arg1: i32, %arg2: i32) -> (i32, i32) {
    %c0_i32 = arith.constant 0 : i32
    return %arg1, %arg2 : i32, i32
  }
  func.func @transform_2(%arg0: i32, %arg1: i32, %arg2: i32) -> (i32, i32) {
    %c0_i32 = arith.constant 0 : i32
    return %arg1, %arg2 : i32, i32
  }
  func.func @transform_3(%arg0: i32, %arg1: i32, %arg2: i32) -> (i32, i32) {
    %c0_i32 = arith.constant 0 : i32
    %c0_i32_0 = arith.constant 0 : i32
    return %c0_i32, %arg1 : i32, i32
  }
  func.func @transform_4(%arg0: i32, %arg1: i32, %arg2: i32) -> (i32, i32) {
    %c0_i32 = arith.constant 0 : i32
    return %arg0, %arg1 : i32, i32
  }
}

</mosaic_0001>

<llo_original>
// kernel: tpu_custom_call.1
$region0: #{tpu_custom_call.1}
  #allocation0 [shape = 'u32[]', space=smem, size = 0x4, offset = 0x4, fixed_abs, tag = 'smem constant byte address 0x4 - core index']
  #allocation1 [shape = 'u32[144,128]{1,0:T(1,128)}', space=vmem, size = 0x12000, scoped, tag = 'internal scratch']
  #allocation2 [shape = 'f32[8,128]{1,0:T(8,128)}', space=vmem, size = 0x1000, scoped, tag = 'scratch operand']
  %s0 = inlined_call_operand.hbm [shape: f32[8,256], index: 0, kind: input, shape index: {}]
  %s1 = inlined_call_operand.hbm [shape: f32[256,256], index: 1, kind: input, shape index: {}]
  %s2 = inlined_call_operand.hbm [shape: f32[256,256], index: 2, kind: input, shape index: {}]
  %s3 = inlined_call_operand.vmem [shape: f32[1,256], index: 3, kind: input, shape index: {}]
  %s4 = inlined_call_operand.hbm [shape: f32[8,256], index: 4, kind: output, shape index: {}]
  %s5 = sld [smem:[#allocation0]]
  $region69: #{tpu_custom_call.1} parent=0
    _
  %s7 = ssub.s32 1, %s5
  %s8 = scalar_select 0, %s7, %s5
  $region1: #{tpu_custom_call.1} parent=0
    #allocation3 [shape = 'u8[8192]{0}', space=vmem, size = 0x2000, scoped, tag = 'input window, operand 0']
    #allocation4 [shape = 's32[2]{0}', space=sflag, size = 0x8, scoped, tag = 'scoped memory for tpu_custom_call.1']
    #allocation5 [shape = 's32[2]{0}', space=sflag, size = 0x8, scoped, tag = 'scoped memory for tpu_custom_call.1']
    #allocation6 [shape = 'u8[131072]{0}', space=vmem, size = 0x20000, scoped, tag = 'input window, operand 1']
    #allocation7 [shape = 's32[2]{0}', space=sflag, size = 0x8, scoped, tag = 'scoped memory for tpu_custom_call.1']
    #allocation8 [shape = 'u8[131072]{0}', space=vmem, size = 0x20000, scoped, tag = 'input window, operand 2']
    #allocation9 [shape = 'u8[8192]{0}', space=vmem, size = 0x2000, scoped, tag = 'output window, operand 0']
    %9 = vsyncpa [#allocation4], 0
    %s10 = scalar_lea.sflag [#allocation4], 1
    %11 = vsyncpa %s10, 0
    %12 = vsyncpa [#allocation7], 0
    %s13 = scalar_lea.sflag [#allocation7], 1
    %14 = vsyncpa %s13, 0
    %15 = vsyncpa [#allocation5], 0
    %s16 = scalar_lea.sflag [#allocation5], 1
    %17 = vsyncpa %s16, 0
    loop: start=0, step=1, limit=6
    $region2: #{tpu_custom_call.1} parent=1 // loop_pre_header
      _
    $region3: #{tpu_custom_call.1} parent=1 // loop_header
      %s19 = sphi 0, %s23
      %p20 = scmp.ge.s32.totalorder %s19, 6
      %s26 = sphi 0, %s45
      %s27 = sphi 0, %s41
      %s28 = sphi 0, %s37
      %s29 = sphi 0, %s26
      %s30 = sphi 0, %s27
      %s31 = sphi 0, %s28
      %s32 = sphi 0, %s29
      %s33 = sphi 0, %s30
      %s34 = sphi 0, %s31
      %s50 = sphi 0, %s52
      %s53 = sphi 0, %s50
      %s54 = sphi 0, %s53
      %s70 = sphi 0, %s54
      %s78 = sphi 0, %s80
      %s81 = sphi 0, %s78
      %s82 = sphi 0, %s81
      %s98 = sphi 0, %s82
      %s106 = sphi 0, %s108
      %s109 = sphi 0, %s106
      %s110 = sphi 0, %s109
      %s126 = sphi 0, %s110
      %s132 = sphi 0, %s134
      %s135 = sphi 0, %s132
      %s136 = sphi 0, %s135
      %s152 = sphi 0, %s136
      %s160 = sphi 0, %s162
      %s163 = sphi 0, %s160
      %s164 = sphi 0, %s163
      %s180 = sphi 0, %s164
    $region4: #{tpu_custom_call.1} parent=1 // loop_header_branch
      %22 = sbr.rel (%p20) target = $region8
    $region5: #{tpu_custom_call.1} parent=1 // loop_body
      %s24 = ssub.s32 %s19, 1
      %s25 = ssub.s32 %s19, 2
      %s35 = sadd.s32 1, %s28
      %p36 = scmp.ge.s32.totalorder %s35, 2
      %s37 = scalar_select %p36, 0, %s35
      %s38 = sadd.s32 1, %s27
      %s39 = scalar_select %p36, %s38, %s27
      %p40 = scmp.ge.s32.totalorder %s39, 2
      %s41 = scalar_select %p40, 0, %s39
      %s42 = sadd.s32 1, %s26
      %s43 = scalar_select %p40, %s42, %s26
      %p44 = scmp.ge.s32.totalorder %s43, 1
      %s45 = scalar_select %p44, 0, %s43
      %s46 = ssub.s32 %s26, %s45
      %s47 = ssub.s32 %s28, %s37
      %s48 = sor.u32 %s46, %s47
      %p49 = scmp.eq.s32.totalorder %s48, 0
      %s51 = sadd.s32 %s50, 1
      %s52 = scalar_select %p49, %s50, %s51
      %p55 = pneg %p49
      %p56 = scmp.eq.s32.totalorder %s19, 3
      %p57 = por %p55, %p56
      %p58 = scmp.ne.s32.totalorder %s50, %s53
      %p59 = scmp.eq.s32.totalorder %s19, 0
      %p60 = por %p58, %p59
      %p61 = scmp.ne.s32.totalorder %s50, %s53
      %p62 = scmp.eq.s32.totalorder %s24, 3
      %p63 = por %p61, %p62
      %p64 = scmp.ne.s32.totalorder %s53, %s54
      %p65 = scmp.eq.s32.totalorder %s24, 0
      %p66 = por %p64, %p65
      %p67 = scmp.ne.s32.totalorder %s53, %s54
      %p68 = scmp.eq.s32.totalorder %s25, 3
      %p69 = por %p67, %p68
      %p71 = scmp.ne.s32.totalorder %s54, %s70
      %p72 = scmp.eq.s32.totalorder %s25, 0
      %p73 = por %p71, %p72
      %s74 = ssub.s32 %s27, %s41
      %s75 = ssub.s32 %s28, %s37
      %s76 = sor.u32 %s74, %s75
      %p77 = scmp.eq.s32.totalorder %s76, 0
      %s79 = sadd.s32 %s78, 1
      %s80 = scalar_select %p77, %s78, %s79
      %p83 = pneg %p77
      %p84 = scmp.eq.s32.totalorder %s19, 3
      %p85 = por %p83, %p84
      %p86 = scmp.ne.s32.totalorder %s78, %s81
      %p87 = scmp.eq.s32.totalorder %s19, 0
      %p88 = por %p86, %p87
      %p89 = scmp.ne.s32.totalorder %s78, %s81
      %p90 = scmp.eq.s32.totalorder %s24, 3
      %p91 = por %p89, %p90
      %p92 = scmp.ne.s32.totalorder %s81, %s82
      %p93 = scmp.eq.s32.totalorder %s24, 0
      %p94 = por %p92, %p93
      %p95 = scmp.ne.s32.totalorder %s81, %s82
      %p96 = scmp.eq.s32.totalorder %s25, 3
      %p97 = por %p95, %p96
      %p99 = scmp.ne.s32.totalorder %s82, %s98
      %p100 = scmp.eq.s32.totalorder %s25, 0
      %p101 = por %p99, %p100
      %s102 = ssub.s32 %s27, %s41
      %s103 = ssub.s32 %s28, %s37
      %s104 = sor.u32 %s102, %s103
      %p105 = scmp.eq.s32.totalorder %s104, 0
      %s107 = sadd.s32 %s106, 1
      %s108 = scalar_select %p105, %s106, %s107
      %p111 = pneg %p105
      %p112 = scmp.eq.s32.totalorder %s19, 3
      %p113 = por %p111, %p112
      %p114 = scmp.ne.s32.totalorder %s106, %s109
      %p115 = scmp.eq.s32.totalorder %s19, 0
      %p116 = por %p114, %p115
      %p117 = scmp.ne.s32.totalorder %s106, %s109
      %p118 = scmp.eq.s32.totalorder %s24, 3
      %p119 = por %p117, %p118
      %p120 = scmp.ne.s32.totalorder %s109, %s110
      %p121 = scmp.eq.s32.totalorder %s24, 0
      %p122 = por %p120, %p121
      %p123 = scmp.ne.s32.totalorder %s109, %s110
      %p124 = scmp.eq.s32.totalorder %s25, 3
      %p125 = por %p123, %p124
      %p127 = scmp.ne.s32.totalorder %s110, %s126
      %p128 = scmp.eq.s32.totalorder %s25, 0
      %p129 = por %p127, %p128
      %s130 = ssub.s32 %s27, %s41
      %p131 = scmp.eq.s32.totalorder %s130, 0
      %s133 = sadd.s32 %s132, 1
      %s134 = scalar_select %p131, %s132, %s133
      %p137 = pneg %p131
      %p138 = scmp.eq.s32.totalorder %s19, 3
      %p139 = por %p137, %p138
      %p140 = scmp.ne.s32.totalorder %s132, %s135
      %p141 = scmp.eq.s32.totalorder %s19, 0
      %p142 = por %p140, %p141
      %p143 = scmp.ne.s32.totalorder %s132, %s135
      %p144 = scmp.eq.s32.totalorder %s24, 3
      %p145 = por %p143, %p144
      %p146 = scmp.ne.s32.totalorder %s135, %s136
      %p147 = scmp.eq.s32.totalorder %s24, 0
      %p148 = por %p146, %p147
      %p149 = scmp.ne.s32.totalorder %s135, %s136
      %p150 = scmp.eq.s32.totalorder %s25, 3
      %p151 = por %p149, %p150
      %p153 = scmp.ne.s32.totalorder %s136, %s152
      %p154 = scmp.eq.s32.totalorder %s25, 0
      %p155 = por %p153, %p154
      %s156 = ssub.s32 %s26, %s45
      %s157 = ssub.s32 %s27, %s41
      %s158 = sor.u32 %s156, %s157
      %p159 = scmp.eq.s32.totalorder %s158, 0
      %s161 = sadd.s32 %s160, 1
      %s162 = scalar_select %p159, %s160, %s161
      %p165 = pneg %p159
      %p166 = scmp.eq.s32.totalorder %s19, 3
      %p167 = por %p165, %p166
      %p168 = scmp.ne.s32.totalorder %s160, %s163
      %p169 = scmp.eq.s32.totalorder %s19, 0
      %p170 = por %p168, %p169
      %p171 = scmp.ne.s32.totalorder %s160, %s163
      %p172 = scmp.eq.s32.totalorder %s24, 3
      %p173 = por %p171, %p172
      %p174 = scmp.ne.s32.totalorder %s163, %s164
      %p175 = scmp.eq.s32.totalorder %s24, 0
      %p176 = por %p174, %p175
      %p177 = scmp.ne.s32.totalorder %s163, %s164
      %p178 = scmp.eq.s32.totalorder %s25, 3
      %p179 = por %p177, %p178
      %p181 = scmp.ne.s32.totalorder %s164, %s180
      %p182 = scmp.eq.s32.totalorder %s25, 0
      %p183 = por %p181, %p182
      %p184 = scmp.le.s32.totalorder 1, %s19
      %p185 = scmp.lt.s32.totalorder %s19, 5
      %p186 = pnand %p184, %p185
      %p187 = pneg %p186
      // Predicated region
      $region9: #{tpu_custom_call.1} parent=5 // pred_check
        _
      $region10: #{tpu_custom_call.1} parent=5 // pred_check_branch
        %189 = sbr.rel (%p186) target = $region12
      $region11: #{tpu_custom_call.1} parent=5 // pred_region
        %s190 = ssub.s32 %s19, 1
      $region12: #{tpu_custom_call.1} parent=5 // pred_fallthru
        _
      %p191 = scmp.lt.s32.totalorder %s19, 4
      // Predicated region
      $region13: #{tpu_custom_call.1} parent=5 // pred_check
        %p192 = pneg %p191
      $region14: #{tpu_custom_call.1} parent=5 // pred_check_branch
        %194 = sbr.rel (%p192) target = $region16
      $region15: #{tpu_custom_call.1} parent=5 // pred_region
        // Predicated region
        $region17: #{tpu_custom_call.1} parent=15 // pred_check
          %p195 = pneg %p60
        $region18: #{tpu_custom_call.1} parent=15 // pred_check_branch
          %197 = sbr.rel (%p195) target = $region20
        $region19: #{tpu_custom_call.1} parent=15 // pred_region
          %s198 = sand.u32 %s50, 1
          %s199 = scalar_lea.sflag [#allocation4], %s198
          %s200 = sand.u32 %s50, 1
          %s201 = smul.addr %s200, 8
          %s202 = scalar_lea.vmem [#allocation3], %s201
          %s204 = ssub.s32 128, 128
          %205 = vsyncadd %s199, %s204
          %s206 = smul.addr %s26, 2
          %s207 = sadd.s32 %s28, %s206
          %s208 = smul.addr %s207, 128
          %s209 = scalar_lea.hbm %s0, %s208
          %s211 = sshll.u32 %s202, 4
          %s212 = int_to_ptr.vmem [resolvable:$true] %s211
          %214 = dma.hbm_to_vmem [thread:$0]  %s209, 128, %s212, %s199
        $region20: #{tpu_custom_call.1} parent=15 // pred_fallthru
          _
        // Predicated region
        $region21: #{tpu_custom_call.1} parent=15 // pred_check
          %p215 = pneg %p88
        $region22: #{tpu_custom_call.1} parent=15 // pred_check_branch
          %217 = sbr.rel (%p215) target = $region24
        $region23: #{tpu_custom_call.1} parent=15 // pred_region
          %s218 = sand.u32 %s19, 1
          %s219 = scalar_lea.sflag [#allocation7], %s218
          %s220 = sand.u32 %s78, 1
          %s221 = smul.addr %s220, 128
          %s222 = scalar_lea.vmem [#allocation6], %s221
          %s223 = smul.u32 16, %s27
          %s225 = ssub.s32 2048, 2048
          %226 = vsyncadd %s219, %s225
          %s227 = smul.addr %s223, 2
          %s228 = sadd.s32 %s28, %s227
          %s229 = smul.addr %s228, 128
          %s230 = scalar_lea.hbm %s1, %s229
          %s231 = sshll.u32 %s222, 4
          %s232 = int_to_ptr.vmem [resolvable:$true] %s231
          %237 = dma.hbm_to_vmem [thread:$0]  %s230, 2048, %s232, %s219, 256, 128, 8
        $region24: #{tpu_custom_call.1} parent=15 // pred_fallthru
          _
        // Predicated region
        $region25: #{tpu_custom_call.1} parent=15 // pred_check
          %p238 = pneg %p116
        $region26: #{tpu_custom_call.1} parent=15 // pred_check_branch
          %240 = sbr.rel (%p238) target = $region28
        $region27: #{tpu_custom_call.1} parent=15 // pred_region
          %s241 = sand.u32 %s19, 1
          %s242 = scalar_lea.sflag [#allocation7], %s241
          %s243 = sand.u32 %s106, 1
          %s244 = smul.addr %s243, 128
          %s245 = scalar_lea.vmem [#allocation8], %s244
          %s246 = smul.u32 16, %s27
          %s248 = ssub.s32 2048, 2048
          %249 = vsyncadd %s242, %s248
          %s250 = smul.addr %s246, 2
          %s251 = sadd.s32 %s28, %s250
          %s252 = smul.addr %s251, 128
          %s253 = scalar_lea.hbm %s2, %s252
          %s254 = sshll.u32 %s245, 4
          %s255 = int_to_ptr.vmem [resolvable:$true] %s254
          %260 = dma.hbm_to_vmem [thread:$0]  %s253, 2048, %s255, %s242, 256, 128, 8
        $region28: #{tpu_custom_call.1} parent=15 // pred_fallthru
          _
        // Predicated region
        $region29: #{tpu_custom_call.1} parent=15 // pred_check
          %p261 = pneg %p142
        $region30: #{tpu_custom_call.1} parent=15 // pred_check_branch
          %263 = sbr.rel (%p261) target = $region32
        $region31: #{tpu_custom_call.1} parent=15 // pred_region
          %p264 = scmp.lt.s32.totalorder %s27, 1
          %s265 = scalar_select %p264, %s27, 1
          %s266 = scalar_lea.vmem %s3, %s265
        $region32: #{tpu_custom_call.1} parent=15 // pred_fallthru
          _
      $region16: #{tpu_custom_call.1} parent=5 // pred_fallthru
        _
      %p267 = scmp.le.s32.totalorder 1, %s19
      %p268 = scmp.lt.s32.totalorder %s19, 5
      %p269 = pnand %p267, %p268
      %p270 = pneg %p269
      // Predicated region
      $region33: #{tpu_custom_call.1} parent=5 // pred_check
        _
      $region34: #{tpu_custom_call.1} parent=5 // pred_check_branch
        %272 = sbr.rel (%p269) target = $region36
      $region35: #{tpu_custom_call.1} parent=5 // pred_region
        %s273 = ssub.s32 %s19, 1
        %s274 = sand.u32 %s53, 1
        %s275 = scalar_lea.sflag [#allocation4], %s274
        %s276 = sand.u32 %s53, 1
        %s277 = smul.addr %s276, 8
        %s278 = scalar_lea.vmem [#allocation3], %s277
        // Predicated region
        $region37: #{tpu_custom_call.1} parent=35 // pred_check
          %p279 = pneg %p66
        $region38: #{tpu_custom_call.1} parent=35 // pred_check_branch
          %281 = sbr.rel (%p279) target = $region40
        $region39: #{tpu_custom_call.1} parent=35 // pred_region
          %282 = dma.done %s275, 128
        $region40: #{tpu_custom_call.1} parent=35 // pred_fallthru
          _
        %s283 = sand.u32 %s24, 1
        %s284 = scalar_lea.sflag [#allocation7], %s283
        %s285 = sand.u32 %s81, 1
        %s286 = smul.addr %s285, 128
        %s287 = scalar_lea.vmem [#allocation6], %s286
        // Predicated region
        $region41: #{tpu_custom_call.1} parent=35 // pred_check
          %p288 = pneg %p94
        $region42: #{tpu_custom_call.1} parent=35 // pred_check_branch
          %290 = sbr.rel (%p288) target = $region44
        $region43: #{tpu_custom_call.1} parent=35 // pred_region
          %291 = dma.done %s284, 2048
        $region44: #{tpu_custom_call.1} parent=35 // pred_fallthru
          _
        %s292 = sand.u32 %s24, 1
        %s293 = scalar_lea.sflag [#allocation7], %s292
        %s294 = sand.u32 %s109, 1
        %s295 = smul.addr %s294, 128
        %s296 = scalar_lea.vmem [#allocation8], %s295
        // Predicated region
        $region45: #{tpu_custom_call.1} parent=35 // pred_check
          %p297 = pneg %p122
        $region46: #{tpu_custom_call.1} parent=35 // pred_check_branch
          %299 = sbr.rel (%p297) target = $region48
        $region47: #{tpu_custom_call.1} parent=35 // pred_region
          %300 = dma.done %s293, 2048
        $region48: #{tpu_custom_call.1} parent=35 // pred_fallthru
          _
        %s301 = sand.u32 %s53, 1
        %s302 = scalar_lea.sflag [#allocation4], %s301
        %s303 = sand.u32 %s53, 1
        %s304 = smul.addr %s303, 8
        %s305 = scalar_lea.vmem [#allocation3], %s304
        %p306 = pneg %p66
        %p307 = pneg %p63
        %s308 = sand.u32 %s24, 1
        %s309 = scalar_lea.sflag [#allocation7], %s308
        %s310 = sand.u32 %s81, 1
        %s311 = smul.addr %s310, 128
        %s312 = scalar_lea.vmem [#allocation6], %s311
        %p313 = pneg %p94
        %p314 = pneg %p91
        %s315 = sand.u32 %s24, 1
        %s316 = scalar_lea.sflag [#allocation7], %s315
        %s317 = sand.u32 %s109, 1
        %s318 = smul.addr %s317, 128
        %s319 = scalar_lea.vmem [#allocation8], %s318
        %p320 = pneg %p122
        %p321 = pneg %p119
        %p322 = scmp.lt.s32.totalorder %s30, 1
        %s323 = scalar_select %p322, %s30, 1
        %s324 = scalar_lea.vmem %s3, %s323
        %p325 = pneg %p148
        %p326 = pneg %p145
        %p327 = pneg %p176
        %p328 = pneg %p173
        %s329 = sand.u32 %s163, 1
        %s330 = scalar_lea.sflag [#allocation5], %s329
        %s331 = sand.u32 %s163, 1
        %s332 = smul.addr %s331, 8
        %s333 = scalar_lea.vmem [#allocation9], %s332
        %s334 = smul.u32 16, %s30
        %s335 = smul.u32 16, %s30
        %p336 = scmp.lt.s32.totalorder %s30, 1
        %s337 = scalar_select %p336, %s30, 1
        %s338 = scalar_lea.vmem %s3, %s337
        %p339 = scmp.eq.s32.totalorder %s31, 0
        // Predicated region
        $region49: #{tpu_custom_call.1} parent=35 // pred_check
          %p340 = pneg %p339
        $region50: #{tpu_custom_call.1} parent=35 // pred_check_branch
          %342 = sbr.rel (%p340) target = $region52
        $region51: #{tpu_custom_call.1} parent=35 // pred_region
          %343 = vst [vmem:[#allocation2] sm:$0xff] 0.0
        $region52: #{tpu_custom_call.1} parent=35 // pred_fallthru
          _
        %v344 = vld [vmem:[%s287] sm:$0xff]
        %v345 = vld [vmem:[%s287 + $0x8] sm:$0xff]
        %v346 = vld [vmem:[%s287 + $0x10] sm:$0xff]
        %v347 = vld [vmem:[%s287 + $0x18] sm:$0xff]
        %v348 = vld [vmem:[%s287 + $0x20] sm:$0xff]
        %v349 = vld [vmem:[%s287 + $0x28] sm:$0xff]
        %v350 = vld [vmem:[%s287 + $0x30] sm:$0xff]
        %v351 = vld [vmem:[%s287 + $0x38] sm:$0xff]
        %v352 = vld [vmem:[%s287 + $0x40] sm:$0xff]
        %v353 = vld [vmem:[%s287 + $0x48] sm:$0xff]
        %v354 = vld [vmem:[%s287 + $0x50] sm:$0xff]
        %v355 = vld [vmem:[%s287 + $0x58] sm:$0xff]
        %v356 = vld [vmem:[%s287 + $0x60] sm:$0xff]
        %v357 = vld [vmem:[%s287 + $0x68] sm:$0xff]
        %v358 = vld [vmem:[%s287 + $0x70] sm:$0xff]
        %v359 = vld [vmem:[%s287 + $0x78] sm:$0xff]
        %v360 = vld [vmem:[%s296] sm:$0xff]
        %v361 = vld [vmem:[%s296 + $0x8] sm:$0xff]
        %v362 = vld [vmem:[%s296 + $0x10] sm:$0xff]
        %v363 = vld [vmem:[%s296 + $0x18] sm:$0xff]
        %v364 = vld [vmem:[%s296 + $0x20] sm:$0xff]
        %v365 = vld [vmem:[%s296 + $0x28] sm:$0xff]
        %v366 = vld [vmem:[%s296 + $0x30] sm:$0xff]
        %v367 = vld [vmem:[%s296 + $0x38] sm:$0xff]
        %v368 = vld [vmem:[%s296 + $0x40] sm:$0xff]
        %v369 = vld [vmem:[%s296 + $0x48] sm:$0xff]
        %v370 = vld [vmem:[%s296 + $0x50] sm:$0xff]
        %v371 = vld [vmem:[%s296 + $0x58] sm:$0xff]
        %v372 = vld [vmem:[%s296 + $0x60] sm:$0xff]
        %v373 = vld [vmem:[%s296 + $0x68] sm:$0xff]
        %v374 = vld [vmem:[%s296 + $0x70] sm:$0xff]
        %v375 = vld [vmem:[%s296 + $0x78] sm:$0xff]
        %v376 = vmul.f32 %v360, 2.0
        %v377 = vmul.f32 %v361, 2.0
        %v378 = vmul.f32 %v362, 2.0
        %v379 = vmul.f32 %v363, 2.0
        %v380 = vmul.f32 %v364, 2.0
        %v381 = vmul.f32 %v365, 2.0
        %v382 = vmul.f32 %v366, 2.0
        %v383 = vmul.f32 %v367, 2.0
        %v384 = vmul.f32 %v368, 2.0
        %v385 = vmul.f32 %v369, 2.0
        %v386 = vmul.f32 %v370, 2.0
        %v387 = vmul.f32 %v371, 2.0
        %v388 = vmul.f32 %v372, 2.0
        %v389 = vmul.f32 %v373, 2.0
        %v390 = vmul.f32 %v374, 2.0
        %v391 = vmul.f32 %v375, 2.0
        %v392 = vand.u32 2147483647, %v344
        %v393 = vand.u32 2147483647, %v345
        %v394 = vand.u32 2147483647, %v346
        %v395 = vand.u32 2147483647, %v347
        %v396 = vand.u32 2147483647, %v348
        %v397 = vand.u32 2147483647, %v349
        %v398 = vand.u32 2147483647, %v350
        %v399 = vand.u32 2147483647, %v351
        %v400 = vand.u32 2147483647, %v352
        %v401 = vand.u32 2147483647, %v353
        %v402 = vand.u32 2147483647, %v354
        %v403 = vand.u32 2147483647, %v355
        %v404 = vand.u32 2147483647, %v356
        %v405 = vand.u32 2147483647, %v357
        %v406 = vand.u32 2147483647, %v358
        %v407 = vand.u32 2147483647, %v359
        %v408 = vadd.f32 %v392, 1e-16
        %v409 = vadd.f32 %v393, 1e-16
        %v410 = vadd.f32 %v394, 1e-16
        %v411 = vadd.f32 %v395, 1e-16
        %v412 = vadd.f32 %v396, 1e-16
        %v413 = vadd.f32 %v397, 1e-16
        %v414 = vadd.f32 %v398, 1e-16
        %v415 = vadd.f32 %v399, 1e-16
        %v416 = vadd.f32 %v400, 1e-16
        %v417 = vadd.f32 %v401, 1e-16
        %v418 = vadd.f32 %v402, 1e-16
        %v419 = vadd.f32 %v403, 1e-16
        %v420 = vadd.f32 %v404, 1e-16
        %v421 = vadd.f32 %v405, 1e-16
        %v422 = vadd.f32 %v406, 1e-16
        %v423 = vadd.f32 %v407, 1e-16
        %v424 = vlog2.pop %v408
        %v425 = vmul.f32 %v424, 0.6931472
        %v426 = vlog2.pop %v409
        %v427 = vmul.f32 %v426, 0.6931472
        %v428 = vlog2.pop %v410
        %v429 = vmul.f32 %v428, 0.6931472
        %v430 = vlog2.pop %v411
        %v431 = vmul.f32 %v430, 0.6931472
        %v432 = vlog2.pop %v412
        %v433 = vmul.f32 %v432, 0.6931472
        %v434 = vlog2.pop %v413
        %v435 = vmul.f32 %v434, 0.6931472
        %v436 = vlog2.pop %v414
        %v437 = vmul.f32 %v436, 0.6931472
        %v438 = vlog2.pop %v415
        %v439 = vmul.f32 %v438, 0.6931472
        %v440 = vlog2.pop %v416
        %v441 = vmul.f32 %v440, 0.6931472
        %v442 = vlog2.pop %v417
        %v443 = vmul.f32 %v442, 0.6931472
        %v444 = vlog2.pop %v418
        %v445 = vmul.f32 %v444, 0.6931472
        %v446 = vlog2.pop %v419
        %v447 = vmul.f32 %v446, 0.6931472
        %v448 = vlog2.pop %v420
        %v449 = vmul.f32 %v448, 0.6931472
        %v450 = vlog2.pop %v421
        %v451 = vmul.f32 %v450, 0.6931472
        %v452 = vlog2.pop %v422
        %v453 = vmul.f32 %v452, 0.6931472
        %v454 = vlog2.pop %v423
        %v455 = vmul.f32 %v454, 0.6931472
        %v456 = vmul.f32 %v425, 2.0
        %v457 = vmul.f32 %v427, 2.0
        %v458 = vmul.f32 %v429, 2.0
        %v459 = vmul.f32 %v431, 2.0
        %v460 = vmul.f32 %v433, 2.0
        %v461 = vmul.f32 %v435, 2.0
        %v462 = vmul.f32 %v437, 2.0
        %v463 = vmul.f32 %v439, 2.0
        %v464 = vmul.f32 %v441, 2.0
        %v465 = vmul.f32 %v443, 2.0
        %v466 = vmul.f32 %v445, 2.0
        %v467 = vmul.f32 %v447, 2.0
        %v468 = vmul.f32 %v449, 2.0
        %v469 = vmul.f32 %v451, 2.0
        %v470 = vmul.f32 %v453, 2.0
        %v471 = vmul.f32 %v455, 2.0
        %v472 = vsub.f32 %v376, %v456
        %v473 = vsub.f32 %v377, %v457
        %v474 = vsub.f32 %v378, %v458
        %v475 = vsub.f32 %v379, %v459
        %v476 = vsub.f32 %v380, %v460
        %v477 = vsub.f32 %v381, %v461
        %v478 = vsub.f32 %v382, %v462
        %v479 = vsub.f32 %v383, %v463
        %v480 = vsub.f32 %v384, %v464
        %v481 = vsub.f32 %v385, %v465
        %v482 = vsub.f32 %v386, %v466
        %v483 = vsub.f32 %v387, %v467
        %v484 = vsub.f32 %v388, %v468
        %v485 = vsub.f32 %v389, %v469
        %v486 = vsub.f32 %v390, %v470
        %v487 = vsub.f32 %v391, %v471
        %v488 = vmax.f32 %v472, -10.0
        %v489 = vmax.f32 %v473, -10.0
        %v490 = vmax.f32 %v474, -10.0
        %v491 = vmax.f32 %v475, -10.0
        %v492 = vmax.f32 %v476, -10.0
        %v493 = vmax.f32 %v477, -10.0
        %v494 = vmax.f32 %v478, -10.0
        %v495 = vmax.f32 %v479, -10.0
        %v496 = vmax.f32 %v480, -10.0
        %v497 = vmax.f32 %v481, -10.0
        %v498 = vmax.f32 %v482, -10.0
        %v499 = vmax.f32 %v483, -10.0
        %v500 = vmax.f32 %v484, -10.0
        %v501 = vmax.f32 %v485, -10.0
        %v502 = vmax.f32 %v486, -10.0
        %v503 = vmax.f32 %v487, -10.0
        %v504 = vmin.f32 %v488, 10.0
        %v505 = vmin.f32 %v489, 10.0
        %v506 = vmin.f32 %v490, 10.0
        %v507 = vmin.f32 %v491, 10.0
        %v508 = vmin.f32 %v492, 10.0
        %v509 = vmin.f32 %v493, 10.0
        %v510 = vmin.f32 %v494, 10.0
        %v511 = vmin.f32 %v495, 10.0
        %v512 = vmin.f32 %v496, 10.0
        %v513 = vmin.f32 %v497, 10.0
        %v514 = vmin.f32 %v498, 10.0
        %v515 = vmin.f32 %v499, 10.0
        %v516 = vmin.f32 %v500, 10.0
        %v517 = vmin.f32 %v501, 10.0
        %v518 = vmin.f32 %v502, 10.0
        %v519 = vmin.f32 %v503, 10.0
        %vm520 = vcmp.lt.f32.partialorder %v504, 0.0
        %vm521 = vcmp.lt.f32.partialorder %v505, 0.0
        %vm522 = vcmp.lt.f32.partialorder %v506, 0.0
        %vm523 = vcmp.lt.f32.partialorder %v507, 0.0
        %vm524 = vcmp.lt.f32.partialorder %v508, 0.0
        %vm525 = vcmp.lt.f32.partialorder %v509, 0.0
        %vm526 = vcmp.lt.f32.partialorder %v510, 0.0
        %vm527 = vcmp.lt.f32.partialorder %v511, 0.0
        %vm528 = vcmp.lt.f32.partialorder %v512, 0.0
        %vm529 = vcmp.lt.f32.partialorder %v513, 0.0
        %vm530 = vcmp.lt.f32.partialorder %v514, 0.0
        %vm531 = vcmp.lt.f32.partialorder %v515, 0.0
        %vm532 = vcmp.lt.f32.partialorder %v516, 0.0
        %vm533 = vcmp.lt.f32.partialorder %v517, 0.0
        %vm534 = vcmp.lt.f32.partialorder %v518, 0.0
        %vm535 = vcmp.lt.f32.partialorder %v519, 0.0
        %v536 = vsel %vm520, %v344, 0.0
        %v537 = vsel %vm521, %v345, 0.0
        %v538 = vsel %vm522, %v346, 0.0
        %v539 = vsel %vm523, %v347, 0.0
        %v540 = vsel %vm524, %v348, 0.0
        %v541 = vsel %vm525, %v349, 0.0
        %v542 = vsel %vm526, %v350, 0.0
        %v543 = vsel %vm527, %v351, 0.0
        %v544 = vsel %vm528, %v352, 0.0
        %v545 = vsel %vm529, %v353, 0.0
        %v546 = vsel %vm530, %v354, 0.0
        %v547 = vsel %vm531, %v355, 0.0
        %v548 = vsel %vm532, %v356, 0.0
        %v549 = vsel %vm533, %v357, 0.0
        %v550 = vsel %vm534, %v358, 0.0
        %v551 = vsel %vm535, %v359, 0.0
        %v552 = vld [vmem:[#allocation2] sm:$0xff]
        %v553 = vld [vmem:[%s278] sm:$0xff]
        %554 = vmatprep.subr.mxu0 0.0
        %555 = vmatpush1.xpose.msra.mxu0 %v536
        %556 = vmatprep.subr.mxu0 0.0
        %557 = vmatpush1.xpose.msra.mxu0 %v537
        %558 = vmatprep.subr.mxu0 0.0
        %559 = vmatpush1.xpose.msra.mxu0 %v538
        %560 = vmatprep.subr.mxu0 0.0
        %561 = vmatpush1.xpose.msra.mxu0 %v539
        %562 = vmatprep.subr.mxu0 0.0
        %563 = vmatpush1.xpose.msra.mxu0 %v540
        %564 = vmatprep.subr.mxu0 0.0
        %565 = vmatpush1.xpose.msra.mxu0 %v541
        %566 = vmatprep.subr.mxu0 0.0
        %567 = vmatpush1.xpose.msra.mxu0 %v542
        %568 = vmatprep.subr.mxu0 0.0
        %569 = vmatpush1.xpose.msra.mxu0 %v543
        %570 = vmatprep.subr.mxu0 0.0
        %571 = vmatpush1.xpose.msra.mxu0 %v544
        %572 = vmatprep.subr.mxu0 0.0
        %573 = vmatpush1.xpose.msra.mxu0 %v545
        %574 = vmatprep.subr.mxu0 0.0
        %575 = vmatpush1.xpose.msra.mxu0 %v546
        %576 = vmatprep.subr.mxu0 0.0
        %577 = vmatpush1.xpose.msra.mxu0 %v547
        %578 = vmatprep.subr.mxu0 0.0
        %579 = vmatpush1.xpose.msra.mxu0 %v548
        %580 = vmatprep.subr.mxu0 0.0
        %581 = vmatpush1.xpose.msra.mxu0 %v549
        %582 = vmatprep.subr.mxu0 0.0
        %583 = vmatpush1.xpose.msra.mxu0 %v550
        %584 = vmatprep.subr.mxu0 0.0
        %585 = vmatpush1.xpose.msra.mxu0 %v551
        %586 = vmatprep.subr.mxu0 0.0
        %587 = vmatpush1.xpose.msra.mxu0 0.0
        %588 = vmatprep.subr.mxu0 0.0
        %589 = vmatpush1.xpose.msra.mxu0 0.0
        %590 = vmatprep.subr.mxu0 0.0
        %591 = vmatpush1.xpose.msra.mxu0 0.0
        %592 = vmatprep.subr.mxu0 0.0
        %593 = vmatpush1.xpose.msra.mxu0 0.0
        %594 = vmatprep.subr.mxu0 0.0
        %595 = vmatpush1.xpose.msra.mxu0 0.0
        %596 = vmatprep.subr.mxu0 0.0
        %597 = vmatpush1.xpose.msra.mxu0 0.0
        %598 = vmatprep.subr.mxu0 0.0
        %599 = vmatpush1.xpose.msra.mxu0 0.0
        %600 = vmatprep.subr.mxu0 0.0
        %601 = vmatpush1.xpose.msra.mxu0 0.0
        %602 = vmatprep.subr.mxu0 0.0
        %603 = vmatpush1.xpose.msra.mxu0 0.0
        %604 = vmatprep.subr.mxu0 0.0
        %605 = vmatpush1.xpose.msra.mxu0 0.0
        %606 = vmatprep.subr.mxu0 0.0
        %607 = vmatpush1.xpose.msra.mxu0 0.0
        %608 = vmatprep.subr.mxu0 0.0
        %609 = vmatpush1.xpose.msra.mxu0 0.0
        %610 = vmatprep.subr.mxu0 0.0
        %611 = vmatpush1.xpose.msra.mxu0 0.0
        %612 = vmatprep.subr.mxu0 0.0
        %613 = vmatpush1.xpose.msra.mxu0 0.0
        %614 = vmatprep.subr.mxu0 0.0
        %615 = vmatpush1.xpose.msra.mxu0 0.0
        %616 = vmatprep.subr.mxu0 0.0
        %617 = vmatpush1.xpose.msra.mxu0 0.0
        %618 = vmatprep.mubr.f32.mxu0 0.0
        %619 = vmatmul.mubr.f32.gmra.mrb[0].mxu0 %v553
        %v620 = vpop.f32.mrb[0].mxu0
        %v621 = vadd.f32 0.0, %v620
        %v622 = vpop.f32.mrb[0].mxu0
        %623 = vdwg.mxu0
        %v624 = vadd.f32 %v552, %v621
        %625 = vst [vmem:[#allocation2] sm:$0xff] %v624
        %p626 = scmp.eq.s32.totalorder %s31, 1
        // Predicated region
        $region53: #{tpu_custom_call.1} parent=35 // pred_check
          %p627 = pneg %p626
        $region54: #{tpu_custom_call.1} parent=35 // pred_check_branch
          %629 = sbr.rel (%p627) target = $region56
        $region55: #{tpu_custom_call.1} parent=35 // pred_region
          %v630 = vld [vmem:[#allocation2] sm:$0xff]
          %v631 = vld [vmem:[%s338] sm:$0x1]
          %v633 = vlaneseq
          %v634 = vshrl.u32 %v633, 7
          %v635 = vsub.s32 0, %v634
          %v636 = vrot.slane %v631, %v635
          %v638 = vadd.f32 %v630, %v636
          %639 = vst [vmem:[%s333] sm:$0xff] %v638
        $region56: #{tpu_custom_call.1} parent=35 // pred_fallthru
          _
        %s640 = sand.u32 %s163, 1
        %s641 = scalar_lea.sflag [#allocation5], %s640
        %s642 = sand.u32 %s163, 1
        %s643 = smul.addr %s642, 8
        %s644 = scalar_lea.vmem [#allocation9], %s643
        // Predicated region
        $region57: #{tpu_custom_call.1} parent=35 // pred_check
          %p645 = pneg %p173
        $region58: #{tpu_custom_call.1} parent=35 // pred_check_branch
          %647 = sbr.rel (%p645) target = $region60
        $region59: #{tpu_custom_call.1} parent=35 // pred_region
          %s649 = ssub.s32 128, 128
          %650 = vsyncadd %s641, %s649
          %s651 = smul.addr %s29, 2
          %s652 = sadd.s32 %s30, %s651
          %s653 = smul.addr %s652, 128
          %s654 = scalar_lea.hbm %s4, %s653
          %s656 = sshll.u32 %s644, 4
          %s657 = int_to_ptr.vmem [resolvable:$true] %s656
          %659 = dma.vmem_to_hbm [thread:$0]  %s657, 128, %s654, %s641
        $region60: #{tpu_custom_call.1} parent=35 // pred_fallthru
          _
      $region36: #{tpu_custom_call.1} parent=5 // pred_fallthru
        _
      %p660 = scmp.le.s32.totalorder 2, %s19
      // Predicated region
      $region61: #{tpu_custom_call.1} parent=5 // pred_check
        %p661 = pneg %p660
      $region62: #{tpu_custom_call.1} parent=5 // pred_check_branch
        %663 = sbr.rel (%p661) target = $region64
      $region63: #{tpu_custom_call.1} parent=5 // pred_region
        %s664 = ssub.s32 %s19, 2
        // Predicated region
        $region65: #{tpu_custom_call.1} parent=63 // pred_check
          %p665 = pneg %p179
        $region66: #{tpu_custom_call.1} parent=63 // pred_check_branch
          %667 = sbr.rel (%p665) target = $region68
        $region67: #{tpu_custom_call.1} parent=63 // pred_region
          %s668 = sand.u32 %s164, 1
          %s669 = scalar_lea.sflag [#allocation5], %s668
          %s670 = sand.u32 %s164, 1
          %s671 = smul.addr %s670, 8
          %s672 = scalar_lea.vmem [#allocation9], %s671
          %673 = dma.done %s669, 128
        $region68: #{tpu_custom_call.1} parent=63 // pred_fallthru
          _
      $region64: #{tpu_custom_call.1} parent=5 // pred_fallthru
        _
    $region6: #{tpu_custom_call.1} parent=1 // loop_footer
      %s23 = sadd.s32 1, %s19
    $region7: #{tpu_custom_call.1} parent=1 // loop_footer_branch
      %18 = sbr.rel target = $region3
    $region8: #{tpu_custom_call.1} parent=1 // loop_exit
      _
    %674 = vsyncpa [#allocation4], 1
    %s675 = scalar_lea.sflag [#allocation4], 1
    %676 = vsyncpa %s675, 1
    %677 = vsyncpa [#allocation7], 1
    %s678 = scalar_lea.sflag [#allocation7], 1
    %679 = vsyncpa %s678, 1
    %680 = vsyncpa [#allocation5], 1
    %s681 = scalar_lea.sflag [#allocation5], 1
    %682 = vsyncpa %s681, 1

</llo_original>
